<compile_context>
chip_gen: v5e
topology: v5e:2x2
jax: 0.10.0
libtpu: 0.0.40
codegen_flags: <defaults>
</compile_context>

<pallas_src>
import functools
import math

import jax
import jax.numpy as jnp
from jax.experimental import pallas as pl
from jax.experimental.pallas import tpu as pltpu

EPSILON = 1e-40                                     # from the PyTorch module
NEG_LOG_EPSILON = -math.log(EPSILON)                # 92.1034... = torch's value for x <= EPSILON
TINY_F32 = float(jnp.finfo(jnp.float32).tiny)       # smallest NORMAL f32 (TPU flushes subnormals)

LANES = 128
SUBLANES = 8
TARGET_BLOCK_ROWS = 2048   # 2048x128 f32 = 1 MiB / block; ~85% of HBM roofline regime


def _round_up(x: int, m: int) -> int:
    return (x + m - 1) // m * m


def _gloss_kernel(x_ref, o_ref, acc_ref, *, block_rows, valid_rows, inv_count, mask_tail):
    i = pl.program_id(0)

    @pl.when(i == 0)
    def _():
        acc_ref[...] = jnp.zeros_like(acc_ref)

    # Load the narrow dtype straight from HBM and upcast on the VPU (free
    # filler under the memory bottleneck).
    x = x_ref[...].astype(jnp.float32)
    x = jnp.minimum(x, 1.0)
    # Emulate torch.clamp(x, EPSILON, 1.0) followed by -log():  anything below
    # the smallest normal f32 maps to -log(EPSILON) (see header comment).
    nl = jnp.where(x < TINY_F32, jnp.float32(NEG_LOG_EPSILON), -jnp.log(x))

    if mask_tail:
        # The last grid block may be implicitly padded by Pallas with garbage
        # rows; zero their contribution.  (>= 2-D iota as required on TPU.)
        row_ids = jax.lax.broadcasted_iota(jnp.int32, nl.shape, 0) + i * block_rows
        nl = jnp.where(row_ids < valid_rows, nl, 0.0)

    # Per-lane/sublane partial sums: fold the row-block into the (8, 128)
    # accumulator with pure sublane-aligned VPU adds (no per-step XLU reduce,
    # no serial scalar dependency chain, better summation accuracy).
    acc_ref[...] += jnp.sum(nl.reshape(block_rows // SUBLANES, SUBLANES, LANES), axis=0)

    @pl.when(i == pl.num_programs(0) - 1)
    def _():
        # One full cross-lane/sublane reduce + mean over the ORIGINAL count.
        o_ref[...] = jnp.sum(acc_ref[...], keepdims=True) * inv_count


def gloss(logits_gen: jax.Array) -> jax.Array:
    """Returns a scalar float32: mean(-log(clamp(logits_gen, EPSILON, 1.0)))."""
    total_count = int(logits_gen.size)
    itemsize = jnp.dtype(logits_gen.dtype).itemsize

    # Flatten (free bitcast for a contiguous array); keep the original dtype.
    flat = jnp.ravel(logits_gen)

    # Pad (a copy) ONLY if the element count is not lane-aligned; padding with
    # 1.0 contributes -log(1.0) == 0 to the sum and is counted as 0 anyway.
    if flat.size % LANES != 0:
        flat = jnp.pad(flat, (0, LANES - flat.size % LANES), constant_values=1.0)
    x2d = flat.reshape(-1, LANES)
    rows = x2d.shape[0]

    # Row alignment: 8 rows per vreg for 4-byte types, 16 for bf16, 32 for 1B.
    row_align = SUBLANES * max(1, 4 // max(1, itemsize))
    block_rows = min(TARGET_BLOCK_ROWS, _round_up(rows, row_align))
    n_blocks = pl.cdiv(rows, block_rows)
    mask_tail = (rows % block_rows) != 0

    kernel = functools.partial(
        _gloss_kernel,
        block_rows=block_rows,
        valid_rows=rows,
        inv_count=1.0 / float(total_count),
        mask_tail=mask_tail,
    )

    # Advisory cost hint: bandwidth-bound streaming reduction with one log/elem.
    cost = pl.CostEstimate(
        flops=3 * total_count,
        transcendentals=total_count,
        bytes_accessed=total_count * itemsize + 4,
    )

    out = pl.pallas_call(
        kernel,
        out_shape=jax.ShapeDtypeStruct((1, 1), jnp.float32),
        grid_spec=pltpu.PrefetchScalarGridSpec(
            num_scalar_prefetch=0,
            grid=(n_blocks,),
            in_specs=[pl.BlockSpec((block_rows, LANES), lambda i: (i, 0))],
            out_specs=pl.BlockSpec((1, 1), lambda i: (0, 0)),
            scratch_shapes=[pltpu.VMEM((SUBLANES, LANES), jnp.float32)],
        ),
        compiler_params=pltpu.CompilerParams(
            dimension_semantics=("arbitrary",),  # grid axis is a reduction
        ),
        cost_estimate=cost,
    )(x2d)
    return out[0, 0]


if __name__ == "__main__":
    key = jax.random.PRNGKey(0)
    # Discriminator-on-generated "probabilities": shape (batch, channels, H, W)
    x = jax.random.uniform(
        key, (2, 4, 16, 16), dtype=jnp.float32, minval=0.0, maxval=1.0
    )

    loss = gloss(x)
    jax.block_until_ready(loss)

    # Reference check in plain JAX (same semantics as the PyTorch module).
    ref = jnp.mean(-jnp.log(jnp.clip(x, EPSILON, 1.0)))
    assert jnp.allclose(loss, ref, rtol=1e-5, atol=1e-5), (loss, ref)

    print("KERNEL_OK")
</pallas_src>

<mosaic_0001>
module attributes {stable_mosaic.version = 11 : i64} {
  func.func @_gloss_kernel(%arg0: i32, %arg1: memref<16x128xf32, #tpu.memory_space<vmem>>, %arg2: memref<1x1xf32, #tpu.memory_space<vmem>>, %arg3: memref<8x128xf32, #tpu.memory_space<vmem>>) attributes {dimension_semantics = [#tpu.dimension_semantics<arbitrary>], iteration_bounds = array<i64: 1>, scalar_prefetch = 0 : i64, scratch_operands = 1 : i64, tpu.core_type = #tpu.core_type<tc>, window_params = [{transform_indices = @transform_0, window_bounds = array<i64: 16, 128>}, {pipeline_mode = #tpu.pipeline_mode<synchronous>, transform_indices = @transform_1, window_bounds = array<i64: 1, 1>}]} {
    %c0_i32 = arith.constant 0 : i32
    %0 = arith.cmpi eq, %arg0, %c0_i32 : i32
    %1 = arith.extui %0 : i1 to i32
    %c0_i32_0 = arith.constant 0 : i32
    %2 = arith.cmpi ne, %1, %c0_i32_0 : i32
    scf.if %2 {
      %cst_12 = arith.constant 0.000000e+00 : f32
      %21 = vector.broadcast %cst_12 : f32 to vector<8x128xf32>
      %c0_13 = arith.constant 0 : index
      %c0_14 = arith.constant 0 : index
      %22 = vector.load %arg3[%c0_13, %c0_14] : memref<8x128xf32, #tpu.memory_space<vmem>>, vector<8x128xf32>
      tpu.vector_store %arg3[%c0_13, %c0_14], %21 {strides = array<i32>} : memref<8x128xf32, #tpu.memory_space<vmem>>, vector<8x128xf32>,
    } else {
    }
    %c0 = arith.constant 0 : index
    %c0_1 = arith.constant 0 : index
    %3 = vector.load %arg1[%c0, %c0_1] : memref<16x128xf32, #tpu.memory_space<vmem>>, vector<16x128xf32>
    %cst = arith.constant 1.000000e+00 : f32
    %4 = vector.broadcast %cst : f32 to vector<16x128xf32>
    %5 = arith.minimumf %3, %4 : vector<16x128xf32>
    %cst_2 = arith.constant 1.17549435E-38 : f32
    %6 = vector.broadcast %cst_2 : f32 to vector<16x128xf32>
    %7 = arith.cmpf olt, %5, %6 : vector<16x128xf32>
    %8 = math.log %5 : vector<16x128xf32>
    %cst_3 = arith.constant 0.000000e+00 : f32
    %9 = vector.broadcast %cst_3 : f32 to vector<16x128xf32>
    %10 = arith.subf %9, %8 : vector<16x128xf32>
    %cst_4 = arith.constant 9.210340e+01 : f32
    %11 = vector.broadcast %cst_4 : f32 to vector<16x128xf32>
    %12 = arith.select %7, %11, %10 : vector<16x128xi1>, vector<16x128xf32>
    %c0_5 = arith.constant 0 : index
    %c0_6 = arith.constant 0 : index
    %13 = vector.load %arg3[%c0_5, %c0_6] : memref<8x128xf32, #tpu.memory_space<vmem>>, vector<8x128xf32>
    %14 = vector.shape_cast %12 : vector<16x128xf32> to vector<2x8x128xf32>
    %cst_7 = arith.constant dense<0.000000e+00> : vector<8x128xf32>
    %15 = vector.multi_reduction <add>, %14, %cst_7 [0] : vector<2x8x128xf32> to vector<8x128xf32>
    %16 = arith.addf %13, %15 : vector<8x128xf32>
    %c0_8 = arith.constant 0 : index
    %c0_9 = arith.constant 0 : index
    %17 = vector.load %arg3[%c0_8, %c0_9] : memref<8x128xf32, #tpu.memory_space<vmem>>, vector<8x128xf32>
    tpu.vector_store %arg3[%c0_8, %c0_9], %16 {strides = array<i32>} : memref<8x128xf32, #tpu.memory_space<vmem>>, vector<8x128xf32>,
    %c0_i32_10 = arith.constant 0 : i32
    %18 = arith.cmpi eq, %arg0, %c0_i32_10 : i32
    %19 = arith.extui %18 : i1 to i32
    %c0_i32_11 = arith.constant 0 : i32
    %20 = arith.cmpi ne, %19, %c0_i32_11 : i32
    scf.if %20 {
      %c0_12 = arith.constant 0 : index
      %c0_13 = arith.constant 0 : index
      %21 = vector.load %arg3[%c0_12, %c0_13] : memref<8x128xf32, #tpu.memory_space<vmem>>, vector<8x128xf32>
      %22 = vector.shape_cast %21 : vector<8x128xf32> to vector<1x8x128xf32>
      %cst_14 = arith.constant dense<0.000000e+00> : vector<1xf32>
      %23 = vector.multi_reduction <add>, %22, %cst_14 [1, 2] : vector<1x8x128xf32> to vector<1xf32>
      %24 = vector.shape_cast %23 : vector<1xf32> to vector<1x1x1xf32>
      %25 = vector.extract %24[0, 0, 0] : f32 from vector<1x1x1xf32>
      %26 = vector.broadcast %25 : f32 to vector<1x1xf32>
      %cst_15 = arith.constant 4.8828125E-4 : f32
      %27 = vector.broadcast %cst_15 : f32 to vector<1x1xf32>
      %28 = arith.mulf %26, %27 : vector<1x1xf32>
      %c0_16 = arith.constant 0 : index
      %c0_17 = arith.constant 0 : index
      %29 = vector.load %arg2[%c0_16, %c0_17] : memref<1x1xf32, #tpu.memory_space<vmem>>, vector<1x1xf32>
      tpu.vector_store %arg2[%c0_16, %c0_17], %28 {strides = array<i32>} : memref<1x1xf32, #tpu.memory_space<vmem>>, vector<1x1xf32>,
    } else {
    }
    return
  }
  func.func @transform_0(%arg0: i32) -> (i32, i32) {
    %c0_i32 = arith.constant 0 : i32
    %c0_i32_0 = arith.constant 0 : i32
    return %arg0, %c0_i32 : i32, i32
  }
  func.func @transform_1(%arg0: i32) -> (i32, i32) {
    %c0_i32 = arith.constant 0 : i32
    %c0_i32_0 = arith.constant 0 : i32
    %c0_i32_1 = arith.constant 0 : i32
    return %c0_i32, %c0_i32_0 : i32, i32
  }
}

</mosaic_0001>

<llo_original>
// kernel: tpu_custom_call.1
$region0: #{tpu_custom_call.1}
  #allocation0 [shape = 'u32[]', space=smem, size = 0x4, offset = 0x4, fixed_abs, tag = 'smem constant byte address 0x4 - core index']
  #allocation1 [shape = 'u32[72,128]{1,0:T(1,128)}', space=vmem, size = 0x9000, scoped, tag = 'internal scratch']
  #allocation2 [shape = 'f32[8,128]{1,0:T(8,128)}', space=vmem, size = 0x1000, scoped, tag = 'scratch operand']
  %s0 = inlined_call_operand.hbm [shape: f32[16,128], index: 0, kind: input, shape index: {}]
  %s1 = inlined_call_operand.hbm [shape: f32[1,1], index: 1, kind: output, shape index: {}]
  %s2 = sld [smem:[#allocation0]]
  $region26: #{tpu_custom_call.1} parent=0
    _
  %s4 = ssub.s32 1, %s2
  %s5 = scalar_select 0, %s4, %s2
  $region1: #{tpu_custom_call.1} parent=0
    #allocation3 [shape = 'u8[8192]{0}', space=vmem, size = 0x2000, scoped, tag = 'input window, operand 0, single buffered']
    #allocation4 [shape = 's32[1]{0}', space=sflag, size = 0x4, scoped, tag = 'scoped memory for tpu_custom_call.1']
    #allocation5 [shape = 's32[1]{0}', space=sflag, size = 0x4, scoped, tag = 'scoped memory for tpu_custom_call.1']
    #allocation6 [shape = 'u8[512]{0}', space=vmem, size = 0x400, scoped, tag = 'output window, operand 0, single buffered']
    %6 = vsyncpa [#allocation4], 0
    %7 = vsyncpa [#allocation5], 0
    // Predicated region
    $region2: #{tpu_custom_call.1} parent=1 // pred_check
      _
    $region3: #{tpu_custom_call.1} parent=1 // pred_check_branch
      %9 = sbr.rel (0) target = $region5
    $region4: #{tpu_custom_call.1} parent=1 // pred_region
      %11 = vsyncadd [#allocation4], 0
      %s12 = sshll.u32 %s0, 4
      %s13 = int_to_ptr.hbm [resolvable:$true] %s12
      %s14 = sshll.u32 [#allocation3], 4
      %s15 = int_to_ptr.vmem [resolvable:$true] %s14
      %20 = dma.hbm_to_vmem [thread:$0]  %s13, 256, %s15, [#allocation4], 128, 128, 8
    $region5: #{tpu_custom_call.1} parent=1 // pred_fallthru
      _
    // Predicated region
    $region6: #{tpu_custom_call.1} parent=1 // pred_check
      _
    $region7: #{tpu_custom_call.1} parent=1 // pred_check_branch
      %22 = sbr.rel (0) target = $region9
    $region8: #{tpu_custom_call.1} parent=1 // pred_region
      %24 = dma.done [#allocation4], 256
    $region9: #{tpu_custom_call.1} parent=1 // pred_fallthru
      _
    %p25 = scmp.eq.s32.totalorder 0, 0
    // Predicated region
    $region10: #{tpu_custom_call.1} parent=1 // pred_check
      %p26 = pneg %p25
    $region11: #{tpu_custom_call.1} parent=1 // pred_check_branch
      %28 = sbr.rel (%p26) target = $region13
    $region12: #{tpu_custom_call.1} parent=1 // pred_region
      %29 = vst [vmem:[#allocation2] sm:$0xff] 0.0
    $region13: #{tpu_custom_call.1} parent=1 // pred_fallthru
      _
    %v30 = vld [vmem:[#allocation3] sm:$0xff]
    %v31 = vld [vmem:[#allocation3 + $0x8] sm:$0xff]
    %v32 = vmin.f32 %v30, 1.0
    %v33 = vmin.f32 %v31, 1.0
    %vm34 = vcmp.lt.f32.partialorder %v32, 1.1754944e-38
    %vm35 = vcmp.lt.f32.partialorder %v33, 1.1754944e-38
    %v36 = vlog2.pop %v32
    %v37 = vmul.f32 %v36, 0.6931472
    %v38 = vlog2.pop %v33
    %v39 = vmul.f32 %v38, 0.6931472
    %v40 = vsub.f32 0.0, %v37
    %v41 = vsub.f32 0.0, %v39
    %v42 = vsel %vm34, 92.1034, %v40
    %v43 = vsel %vm35, 92.1034, %v41
    %v44 = vld [vmem:[#allocation2] sm:$0xff]
    %v45 = vadd.f32 %v42, %v43
    %v46 = vadd.f32 %v44, %v45
    %47 = vst [vmem:[#allocation2] sm:$0xff] %v46
    // Predicated region
    $region14: #{tpu_custom_call.1} parent=1 // pred_check
      %p48 = pneg %p25
    $region15: #{tpu_custom_call.1} parent=1 // pred_check_branch
      %50 = sbr.rel (%p48) target = $region17
    $region16: #{tpu_custom_call.1} parent=1 // pred_region
      %v51 = vld [vmem:[#allocation2] sm:$0xff]
      %52 = vadd.xlane.f32.xlu0 %v51
      %v53 = vpop.xlane.xlu0 %52
      %v54 = vrot.slane %v53, 4
      %v55 = vadd.f32 %v53, %v54
      %v56 = vrot.slane %v55, 2
      %v57 = vadd.f32 %v55, %v56
      %v58 = vrot.slane %v57, 1
      %v59 = vadd.f32 %v57, %v58
      %s60 = vtos %v59
      %v61 = vstv %s60
      %v62 = vmul.f32 %v61, 0.00048828125
      %vm63 = vcmask 0
      %64 = vst.msk [vmem:[#allocation6] sm:$0x1] %vm63, %v62
    $region17: #{tpu_custom_call.1} parent=1 // pred_fallthru
      _
    // Predicated region
    $region18: #{tpu_custom_call.1} parent=1 // pred_check
      _
    $region19: #{tpu_custom_call.1} parent=1 // pred_check_branch
      %66 = sbr.rel (0) target = $region21
    $region20: #{tpu_custom_call.1} parent=1 // pred_region
      %68 = vsyncadd [#allocation5], 0
      %s70 = sshll.u32 [#allocation6], 4
      %s71 = int_to_ptr.vmem [resolvable:$true] %s70
      %s72 = sshll.u32 %s1, 4
      %s73 = int_to_ptr.hbm [resolvable:$true] %s72
      %75 = dma.vmem_to_hbm [thread:$0]  %s71, 16, %s73, [#allocation5]
    $region21: #{tpu_custom_call.1} parent=1 // pred_fallthru
      _
    // Predicated region
    $region22: #{tpu_custom_call.1} parent=1 // pred_check
      _
    $region23: #{tpu_custom_call.1} parent=1 // pred_check_branch
      %77 = sbr.rel (0) target = $region25
    $region24: #{tpu_custom_call.1} parent=1 // pred_region
      %79 = dma.done [#allocation5], 16
    $region25: #{tpu_custom_call.1} parent=1 // pred_fallthru
      _
    %80 = vsyncpa [#allocation4], 1
    %81 = vsyncpa [#allocation5], 1

</llo_original>
